<compile_context>
chip_gen: v7x
topology: tpu7x:2x2x1
jax: 0.10.0
libtpu: 0.0.40
codegen_flags: <defaults>
</compile_context>

<pallas_src>
import functools

import jax
import jax.numpy as jnp
from jax.experimental import pallas as pl
from jax.experimental.pallas import tpu as pltpu

FOCAL_ALPHA = 0.25
FOCAL_GAMMA = 2.0          # implemented as an explicit square below
DICE_SMOOTH = 1e-6
HYBRID_ALPHA = 0.5

LANES = 128
TARGET_TILE_ROWS = 2048    # (2048, 128) f32 = 1 MiB per input block


def _round_up(x, m):
    return ((x + m - 1) // m) * m


def _cdiv(a, b):
    return (a + b - 1) // b


def _hybrid_sums_kernel(p_ref, t_ref, out_ref, *,
                        tile_r, tiles_per_shard, n_tiles,
                        last_tile_rows, tail_partial, has_overflow):
    s = pl.program_id(0)              # shard (parallel across TensorCores)
    i = pl.program_id(1)              # tile within shard (sequential reduction)
    g = s * tiles_per_shard + i       # global tile index
    last = n_tiles - 1

    # Output block is VMEM-resident across the i axis -> use it as accumulator.
    @pl.when(i == 0)
    def _():
        out_ref[...] = jnp.zeros_like(out_ref)

    x = p_ref[...].astype(jnp.float32)
    t = t_ref[...].astype(jnp.float32)

    # Numerically stable BCE-with-logits (matches binary_cross_entropy_with_logits);
    # exp(-|x|) is reused for the sigmoid.
    e = jnp.exp(-jnp.abs(x))
    bce = jnp.maximum(x, 0.0) - x * t + jnp.log1p(e)
    pt = jnp.exp(-bce)                # exact semantics (valid for soft labels)
    omp = 1.0 - pt
    focal = (omp * omp) * bce         # FOCAL_ALPHA applied in the epilogue
    inv_1pe = 1.0 / (1.0 + e)         # exact divide: keeps rtol=1e-5 vs reference
    sig = jnp.where(x >= 0.0, inv_1pe, e * inv_1pe)
    st = sig * t

    def fold8(v):
        # (tile_r, 128) -> (8, 128): pure vreg-wise VPU adds, no cross-sublane
        # work; the final cross-lane/sublane reduce happens in the epilogue.
        return jnp.sum(v.reshape(tile_r // 8, 8, LANES), axis=0)

    def accumulate(f_v, i_v, s_v, t_v):
        # Full (8,128)-aligned unmasked read-modify-writes into the out block.
        out_ref[0:8, :] += fold8(f_v)       # focal partial sums
        out_ref[8:16, :] += fold8(i_v)      # sigmoid * target (intersection)
        out_ref[16:24, :] += fold8(s_v)     # sigmoid
        out_ref[24:32, :] += fold8(t_v)     # target

    if tail_partial:
        # Steady-state tiles: mask-free fast path.
        @pl.when(g < last)
        def _():
            accumulate(focal, st, sig, t)

        # Single boundary tile: Pallas pads the partial block with undefined
        # data -> jnp.where so NaN/Inf cannot leak into the sums.
        @pl.when(g == last)
        def _():
            row_ids = jax.lax.broadcasted_iota(jnp.int32, (tile_r, LANES), 0)
            valid = row_ids < last_tile_rows
            accumulate(jnp.where(valid, focal, 0.0),
                       jnp.where(valid, st, 0.0),
                       jnp.where(valid, sig, 0.0),
                       jnp.where(valid, t, 0.0))
        # Overflow tiles (g > last, only when the shard split is uneven) fall
        # through: no accumulation, DMA index is clamped in the index_map.
    elif has_overflow:
        @pl.when(g <= last)
        def _():
            accumulate(focal, st, sig, t)
    else:
        accumulate(focal, st, sig, t)


def _partial_sums_jax(x, t):
    """Pure-JAX per-element sums for the (tiny) lane tail / too-small inputs."""
    x = x.astype(jnp.float32)
    t = t.astype(jnp.float32)
    e = jnp.exp(-jnp.abs(x))
    bce = jnp.maximum(x, 0.0) - x * t + jnp.log1p(e)
    pt = jnp.exp(-bce)
    sig = jnp.where(x >= 0.0, 1.0 / (1.0 + e), e / (1.0 + e))
    return (jnp.sum(jnp.square(1.0 - pt) * bce),
            jnp.sum(sig * t),
            jnp.sum(sig),
            jnp.sum(t))


def hybrid_loss(preds, targets, *, target_tile_rows=TARGET_TILE_ROWS):
    """Pallas TPU implementation of HybridLoss.forward (focal reduction='mean')."""
    assert preds.shape == targets.shape
    n_elems = preds.size

    p = preds.reshape(-1)              # native dtype; cast to f32 in-kernel
    t = targets.reshape(-1)

    # Split into a lane-dense (rows, 128) main part (kernel) and a <128-element
    # tail (epilogue).  Inputs smaller than one 8-row vreg go fully to the
    # epilogue so the kernel never sees a block larger than the array.
    rows = n_elems // LANES
    if rows < 8:
        rows = 0
    n_main = rows * LANES
    n_tail = n_elems - n_main

    if rows > 0:
        tile_r = min(_round_up(target_tile_rows, 8), (rows // 8) * 8)
        n_tiles = _cdiv(rows, tile_r)
        num_shards = 2 if n_tiles >= 2 else 1          # unconditional megacore split
        tiles_per_shard = _cdiv(n_tiles, num_shards)
        has_overflow = num_shards * tiles_per_shard != n_tiles
        last_tile_rows = rows - (n_tiles - 1) * tile_r
        tail_partial = last_tile_rows != tile_r

        p2 = (p[:n_main] if n_tail else p).reshape(rows, LANES)
        t2 = (t[:n_main] if n_tail else t).reshape(rows, LANES)

        kernel = functools.partial(
            _hybrid_sums_kernel,
            tile_r=tile_r,
            tiles_per_shard=tiles_per_shard,
            n_tiles=n_tiles,
            last_tile_rows=last_tile_rows,
            tail_partial=tail_partial,
            has_overflow=has_overflow,
        )

        if has_overflow:
            def in_index(s, i):
                return (jnp.minimum(s * tiles_per_shard + i, n_tiles - 1), 0)
        else:
            def in_index(s, i):
                return (s * tiles_per_shard + i, 0)

        in_spec = pl.BlockSpec((tile_r, LANES), in_index)

        partials = pl.pallas_call(
            kernel,
            out_shape=jax.ShapeDtypeStruct((num_shards * 32, LANES), jnp.float32),
            grid_spec=pltpu.PrefetchScalarGridSpec(
                num_scalar_prefetch=0,
                grid=(num_shards, tiles_per_shard),
                in_specs=[in_spec, in_spec],
                out_specs=pl.BlockSpec((32, LANES), lambda s, i: (s, 0)),
            ),
            compiler_params=pltpu.CompilerParams(
                dimension_semantics=("parallel", "arbitrary")),
        )(p2, t2)

        # Tiny epilogue: cross-lane / cross-sublane / cross-shard reduction.
        partials = partials.reshape(num_shards, 4, 8, LANES)
        sums = jnp.sum(partials, axis=(0, 2, 3))
        focal_sum, intersection, sum_preds, sum_targets = (
            sums[0], sums[1], sums[2], sums[3])
    else:
        focal_sum = intersection = sum_preds = sum_targets = jnp.float32(0.0)

    if n_tail > 0:
        f_t, i_t, s_t, t_t = _partial_sums_jax(p[n_main:], t[n_main:])
        focal_sum = focal_sum + f_t
        intersection = intersection + i_t
        sum_preds = sum_preds + s_t
        sum_targets = sum_targets + t_t

    focal_loss = FOCAL_ALPHA * focal_sum / jnp.float32(n_elems)   # reduction='mean'
    dice_score = (2.0 * intersection + DICE_SMOOTH) / (
        sum_preds + sum_targets + DICE_SMOOTH)
    dice_loss = 1.0 - dice_score
    return HYBRID_ALPHA * focal_loss + (1.0 - HYBRID_ALPHA) * dice_loss


def _reference_hybrid_loss(preds, targets):
    """Pure-JAX reference for correctness checking."""
    x = preds.astype(jnp.float32)
    t = targets.astype(jnp.float32)
    bce = jnp.maximum(x, 0.0) - x * t + jnp.log1p(jnp.exp(-jnp.abs(x)))
    pt = jnp.exp(-bce)
    focal = (FOCAL_ALPHA * jnp.square(1.0 - pt) * bce).mean()
    s = jax.nn.sigmoid(x)
    inter = jnp.sum(s * t)
    dice = 1.0 - (2.0 * inter + DICE_SMOOTH) / (jnp.sum(s) + jnp.sum(t) + DICE_SMOOTH)
    return HYBRID_ALPHA * focal + (1.0 - HYBRID_ALPHA) * dice


if __name__ == "__main__":
    key = jax.random.PRNGKey(0)
    k1, k2, k3, k4, k5, k6 = jax.random.split(key, 6)

    # Primary check: segmentation-style shape (batch=2, channels=4, 16x16).
    preds = jax.random.normal(k1, (2, 4, 16, 16), dtype=jnp.float32)
    targets = (jax.random.uniform(k2, (2, 4, 16, 16)) > 0.5).astype(jnp.float32)
    loss = jax.block_until_ready(hybrid_loss(preds, targets))
    ref = jax.block_until_ready(_reference_hybrid_loss(preds, targets))
    assert jnp.allclose(loss, ref, rtol=1e-5, atol=1e-6), (loss, ref)

    # Ragged 1-D shape 2502 = 19*128 + 70: exercises the partial boundary tile
    # (pl.when-gated mask) and the <128-element JAX tail.
    preds_r = jax.random.normal(k3, (2502,), dtype=jnp.float32)
    targets_r = (jax.random.uniform(k4, (2502,)) > 0.5).astype(jnp.float32)
    loss_r = jax.block_until_ready(hybrid_loss(preds_r, targets_r))
    ref_r = jax.block_until_ready(_reference_hybrid_loss(preds_r, targets_r))
    assert jnp.allclose(loss_r, ref_r, rtol=1e-5, atol=1e-6), (loss_r, ref_r)

    # Small tile override on the ragged shape: odd tile count -> unconditional
    # 2-shard split with clamped+skipped overflow tile, multi-tile accumulation.
    loss_s = jax.block_until_ready(hybrid_loss(preds_r, targets_r, target_tile_rows=8))
    assert jnp.allclose(loss_s, ref_r, rtol=1e-5, atol=1e-6), (loss_s, ref_r)

    # Tiny ragged 4-D shape (< one vreg of rows): pure-epilogue fallback path.
    preds_t = jax.random.normal(k5, (2, 3, 7, 5), dtype=jnp.float32)
    targets_t = (jax.random.uniform(k6, (2, 3, 7, 5)) > 0.5).astype(jnp.float32)
    loss_t = jax.block_until_ready(hybrid_loss(preds_t, targets_t))
    ref_t = jax.block_until_ready(_reference_hybrid_loss(preds_t, targets_t))
    assert jnp.allclose(loss_t, ref_t, rtol=1e-5, atol=1e-6), (loss_t, ref_t)

    print("KERNEL_OK")
</pallas_src>

<mosaic_0001>
module attributes {stable_mosaic.version = 11 : i64} {
  func.func @_hybrid_sums_kernel(%arg0: i32, %arg1: i32, %arg2: memref<16x128xf32, #tpu.memory_space<vmem>>, %arg3: memref<16x128xf32, #tpu.memory_space<vmem>>, %arg4: memref<32x128xf32, #tpu.memory_space<vmem>>) attributes {dimension_semantics = [#tpu.dimension_semantics<parallel>, #tpu.dimension_semantics<arbitrary>], iteration_bounds = array<i64: 1, 1>, scalar_prefetch = 0 : i64, scratch_operands = 0 : i64, tpu.core_type = #tpu.core_type<tc>, window_params = [{transform_indices = @transform_0, window_bounds = array<i64: 16, 128>}, {transform_indices = @transform_1, window_bounds = array<i64: 16, 128>}, {transform_indices = @transform_2, window_bounds = array<i64: 32, 128>}]} {
    %c0_i32 = arith.constant 0 : i32
    %0 = arith.cmpi eq, %arg1, %c0_i32 : i32
    %1 = arith.extui %0 : i1 to i32
    %c0_i32_0 = arith.constant 0 : i32
    %2 = arith.cmpi ne, %1, %c0_i32_0 : i32
    scf.if %2 {
      %cst_27 = arith.constant 0.000000e+00 : f32
      %51 = vector.broadcast %cst_27 : f32 to vector<32x128xf32>
      %c0_28 = arith.constant 0 : index
      %c0_29 = arith.constant 0 : index
      %52 = vector.load %arg4[%c0_28, %c0_29] : memref<32x128xf32, #tpu.memory_space<vmem>>, vector<32x128xf32>
      tpu.vector_store %arg4[%c0_28, %c0_29], %51 {strides = array<i32>} : memref<32x128xf32, #tpu.memory_space<vmem>>, vector<32x128xf32>,
    } else {
    }
    %c0 = arith.constant 0 : index
    %c0_1 = arith.constant 0 : index
    %3 = vector.load %arg2[%c0, %c0_1] : memref<16x128xf32, #tpu.memory_space<vmem>>, vector<16x128xf32>
    %c0_2 = arith.constant 0 : index
    %c0_3 = arith.constant 0 : index
    %4 = vector.load %arg3[%c0_2, %c0_3] : memref<16x128xf32, #tpu.memory_space<vmem>>, vector<16x128xf32>
    %5 = math.absf %3 : vector<16x128xf32>
    %cst = arith.constant 0.000000e+00 : f32
    %6 = vector.broadcast %cst : f32 to vector<16x128xf32>
    %7 = arith.subf %6, %5 : vector<16x128xf32>
    %8 = math.exp %7 : vector<16x128xf32>
    %cst_4 = arith.constant 0.000000e+00 : f32
    %9 = vector.broadcast %cst_4 : f32 to vector<16x128xf32>
    %10 = arith.maximumf %3, %9 : vector<16x128xf32>
    %11 = arith.mulf %3, %4 : vector<16x128xf32>
    %12 = arith.subf %10, %11 : vector<16x128xf32>
    %13 = math.log1p %8 : vector<16x128xf32>
    %14 = arith.addf %12, %13 : vector<16x128xf32>
    %cst_5 = arith.constant 0.000000e+00 : f32
    %15 = vector.broadcast %cst_5 : f32 to vector<16x128xf32>
    %16 = arith.subf %15, %14 : vector<16x128xf32>
    %17 = math.exp %16 : vector<16x128xf32>
    %cst_6 = arith.constant 1.000000e+00 : f32
    %18 = vector.broadcast %cst_6 : f32 to vector<16x128xf32>
    %19 = arith.subf %18, %17 : vector<16x128xf32>
    %20 = arith.mulf %19, %19 : vector<16x128xf32>
    %21 = arith.mulf %20, %14 : vector<16x128xf32>
    %cst_7 = arith.constant 1.000000e+00 : f32
    %22 = vector.broadcast %cst_7 : f32 to vector<16x128xf32>
    %23 = arith.addf %22, %8 : vector<16x128xf32>
    %cst_8 = arith.constant 1.000000e+00 : f32
    %24 = vector.broadcast %cst_8 : f32 to vector<16x128xf32>
    %25 = arith.divf %24, %23 : vector<16x128xf32>
    %cst_9 = arith.constant 0.000000e+00 : f32
    %26 = vector.broadcast %cst_9 : f32 to vector<16x128xf32>
    %27 = arith.cmpf oge, %3, %26 : vector<16x128xf32>
    %28 = arith.mulf %8, %25 : vector<16x128xf32>
    %29 = arith.select %27, %25, %28 : vector<16x128xi1>, vector<16x128xf32>
    %30 = arith.mulf %29, %4 : vector<16x128xf32>
    %c0_10 = arith.constant 0 : index
    %c0_11 = arith.constant 0 : index
    %31 = vector.load %arg4[%c0_10, %c0_11] : memref<32x128xf32, #tpu.memory_space<vmem>>, vector<8x128xf32>
    %32 = vector.shape_cast %21 : vector<16x128xf32> to vector<2x8x128xf32>
    %cst_12 = arith.constant dense<0.000000e+00> : vector<8x128xf32>
    %33 = vector.multi_reduction <add>, %32, %cst_12 [0] : vector<2x8x128xf32> to vector<8x128xf32>
    %34 = arith.addf %31, %33 : vector<8x128xf32>
    %c0_13 = arith.constant 0 : index
    %c0_14 = arith.constant 0 : index
    %35 = vector.load %arg4[%c0_13, %c0_14] : memref<32x128xf32, #tpu.memory_space<vmem>>, vector<8x128xf32>
    tpu.vector_store %arg4[%c0_13, %c0_14], %34 {strides = array<i32>} : memref<32x128xf32, #tpu.memory_space<vmem>>, vector<8x128xf32>,
    %c8 = arith.constant 8 : index
    %c0_15 = arith.constant 0 : index
    %36 = vector.load %arg4[%c8, %c0_15] : memref<32x128xf32, #tpu.memory_space<vmem>>, vector<8x128xf32>
    %37 = vector.shape_cast %30 : vector<16x128xf32> to vector<2x8x128xf32>
    %cst_16 = arith.constant dense<0.000000e+00> : vector<8x128xf32>
    %38 = vector.multi_reduction <add>, %37, %cst_16 [0] : vector<2x8x128xf32> to vector<8x128xf32>
    %39 = arith.addf %36, %38 : vector<8x128xf32>
    %c8_17 = arith.constant 8 : index
    %c0_18 = arith.constant 0 : index
    %40 = vector.load %arg4[%c8_17, %c0_18] : memref<32x128xf32, #tpu.memory_space<vmem>>, vector<8x128xf32>
    tpu.vector_store %arg4[%c8_17, %c0_18], %39 {strides = array<i32>} : memref<32x128xf32, #tpu.memory_space<vmem>>, vector<8x128xf32>,
    %c16 = arith.constant 16 : index
    %c0_19 = arith.constant 0 : index
    %41 = vector.load %arg4[%c16, %c0_19] : memref<32x128xf32, #tpu.memory_space<vmem>>, vector<8x128xf32>
    %42 = vector.shape_cast %29 : vector<16x128xf32> to vector<2x8x128xf32>
    %cst_20 = arith.constant dense<0.000000e+00> : vector<8x128xf32>
    %43 = vector.multi_reduction <add>, %42, %cst_20 [0] : vector<2x8x128xf32> to vector<8x128xf32>
    %44 = arith.addf %41, %43 : vector<8x128xf32>
    %c16_21 = arith.constant 16 : index
    %c0_22 = arith.constant 0 : index
    %45 = vector.load %arg4[%c16_21, %c0_22] : memref<32x128xf32, #tpu.memory_space<vmem>>, vector<8x128xf32>
    tpu.vector_store %arg4[%c16_21, %c0_22], %44 {strides = array<i32>} : memref<32x128xf32, #tpu.memory_space<vmem>>, vector<8x128xf32>,
    %c24 = arith.constant 24 : index
    %c0_23 = arith.constant 0 : index
    %46 = vector.load %arg4[%c24, %c0_23] : memref<32x128xf32, #tpu.memory_space<vmem>>, vector<8x128xf32>
    %47 = vector.shape_cast %4 : vector<16x128xf32> to vector<2x8x128xf32>
    %cst_24 = arith.constant dense<0.000000e+00> : vector<8x128xf32>
    %48 = vector.multi_reduction <add>, %47, %cst_24 [0] : vector<2x8x128xf32> to vector<8x128xf32>
    %49 = arith.addf %46, %48 : vector<8x128xf32>
    %c24_25 = arith.constant 24 : index
    %c0_26 = arith.constant 0 : index
    %50 = vector.load %arg4[%c24_25, %c0_26] : memref<32x128xf32, #tpu.memory_space<vmem>>, vector<8x128xf32>
    tpu.vector_store %arg4[%c24_25, %c0_26], %49 {strides = array<i32>} : memref<32x128xf32, #tpu.memory_space<vmem>>, vector<8x128xf32>,
    return
  }
  func.func @transform_0(%arg0: i32, %arg1: i32) -> (i32, i32) {
    %c1_i32 = arith.constant 1 : i32
    %0 = arith.muli %arg0, %c1_i32 : i32
    %1 = arith.addi %0, %arg1 : i32
    %c0_i32 = arith.constant 0 : i32
    %c0_i32_0 = arith.constant 0 : i32
    return %1, %c0_i32 : i32, i32
  }
  func.func @transform_1(%arg0: i32, %arg1: i32) -> (i32, i32) {
    %c1_i32 = arith.constant 1 : i32
    %0 = arith.muli %arg0, %c1_i32 : i32
    %1 = arith.addi %0, %arg1 : i32
    %c0_i32 = arith.constant 0 : i32
    %c0_i32_0 = arith.constant 0 : i32
    return %1, %c0_i32 : i32, i32
  }
  func.func @transform_2(%arg0: i32, %arg1: i32) -> (i32, i32) {
    %c0_i32 = arith.constant 0 : i32
    %c0_i32_0 = arith.constant 0 : i32
    return %arg0, %c0_i32 : i32, i32
  }
}

</mosaic_0001>

<llo_original>
// kernel: tpu_custom_call.1
$region0: #{tpu_custom_call.1}
  #allocation0 [shape = 'u32[]', space=smem, size = 0x4, offset = 0x4, fixed_abs, tag = 'smem constant byte address 0x4 - core index']
  #allocation1 [shape = 'u32[144,128]{1,0:T(1,128)}', space=vmem, size = 0x12000, scoped, tag = 'internal scratch']
  %s0 = inlined_call_operand.hbm [shape: f32[16,128], index: 0, kind: input, shape index: {}]
  %s1 = inlined_call_operand.hbm [shape: f32[16,128], index: 1, kind: input, shape index: {}]
  %s2 = inlined_call_operand.hbm [shape: f32[32,128], index: 2, kind: output, shape index: {}]
  %s3 = sld [smem:[#allocation0]]
  $region30: #{tpu_custom_call.1} parent=0
    _
  %s5 = ssub.s32 1, %s3
  %s6 = scalar_select 0, %s5, %s3
  $region1: #{tpu_custom_call.1} parent=0
    #allocation2 [shape = 'u8[8192]{0}', space=vmem, size = 0x2000, scoped, tag = 'input window, operand 0, single buffered']
    #allocation3 [shape = 's32[1]{0}', space=sflag, size = 0x4, scoped, tag = 'scoped memory for tpu_custom_call.1']
    #allocation4 [shape = 's32[1]{0}', space=sflag, size = 0x4, scoped, tag = 'scoped memory for tpu_custom_call.1']
    #allocation5 [shape = 'u8[8192]{0}', space=vmem, size = 0x2000, scoped, tag = 'input window, operand 1, single buffered']
    #allocation6 [shape = 's32[1]{0}', space=sflag, size = 0x4, scoped, tag = 'scoped memory for tpu_custom_call.1']
    #allocation7 [shape = 'u8[16384]{0}', space=vmem, size = 0x4000, scoped, tag = 'output window, operand 0, single buffered']
    %7 = vsyncpa [#allocation3], 0
    %8 = vsyncpa [#allocation6], 0
    %9 = vsyncpa [#allocation4], 0
    // Predicated region
    $region2: #{tpu_custom_call.1} parent=1 // pred_check
      _
    $region3: #{tpu_custom_call.1} parent=1 // pred_check_branch
      %11 = sbr.rel (0) target = $region5
    $region4: #{tpu_custom_call.1} parent=1 // pred_region
      %s12 = sadd.s32 0, 0
      %s13 = smul.u32 2, %s12
      %s15 = ssub.s32 256, 256
      %16 = vsyncadd [#allocation3], %s15
      %s17 = smul.addr %s13, 128
      %s18 = scalar_lea.hbm %s0, %s17
      %s19 = sshll.u32 [#allocation2], 4
      %s20 = int_to_ptr.vmem [resolvable:$true] %s19
      %25 = dma.hbm_to_vmem [thread:$0]  %s18, 256, %s20, [#allocation3], 128, 128, 8
    $region5: #{tpu_custom_call.1} parent=1 // pred_fallthru
      _
    // Predicated region
    $region6: #{tpu_custom_call.1} parent=1 // pred_check
      _
    $region7: #{tpu_custom_call.1} parent=1 // pred_check_branch
      %27 = sbr.rel (0) target = $region9
    $region8: #{tpu_custom_call.1} parent=1 // pred_region
      %s28 = sadd.s32 0, 0
      %s29 = smul.u32 2, %s28
      %s31 = ssub.s32 256, 256
      %32 = vsyncadd [#allocation6], %s31
      %s33 = smul.addr %s29, 128
      %s34 = scalar_lea.hbm %s1, %s33
      %s35 = sshll.u32 [#allocation5], 4
      %s36 = int_to_ptr.vmem [resolvable:$true] %s35
      %41 = dma.hbm_to_vmem [thread:$0]  %s34, 256, %s36, [#allocation6], 128, 128, 8
    $region9: #{tpu_custom_call.1} parent=1 // pred_fallthru
      _
    // Predicated region
    $region10: #{tpu_custom_call.1} parent=1 // pred_check
      _
    $region11: #{tpu_custom_call.1} parent=1 // pred_check_branch
      %43 = sbr.rel (0) target = $region13
    $region12: #{tpu_custom_call.1} parent=1 // pred_region
      %44 = dma.done [#allocation3], 256
    $region13: #{tpu_custom_call.1} parent=1 // pred_fallthru
      _
    // Predicated region
    $region14: #{tpu_custom_call.1} parent=1 // pred_check
      _
    $region15: #{tpu_custom_call.1} parent=1 // pred_check_branch
      %46 = sbr.rel (0) target = $region17
    $region16: #{tpu_custom_call.1} parent=1 // pred_region
      %47 = dma.done [#allocation6], 256
    $region17: #{tpu_custom_call.1} parent=1 // pred_fallthru
      _
    %s48 = sadd.s32 0, 0
    %s49 = smul.u32 2, %s48
    %s50 = sadd.s32 0, 0
    %s51 = smul.u32 2, %s50
    %p52 = scmp.eq.s32.totalorder 0, 0
    // Predicated region
    $region18: #{tpu_custom_call.1} parent=1 // pred_check
      %p53 = pneg %p52
    $region19: #{tpu_custom_call.1} parent=1 // pred_check_branch
      %55 = sbr.rel (%p53) target = $region21
    $region20: #{tpu_custom_call.1} parent=1 // pred_region
      %56 = vst [vmem:[#allocation7] sm:$0xff] 0.0
      %57 = vst [vmem:[#allocation7 + $0x8] sm:$0xff] 0.0
      %58 = vst [vmem:[#allocation7 + $0x10] sm:$0xff] 0.0
      %59 = vst [vmem:[#allocation7 + $0x18] sm:$0xff] 0.0
    $region21: #{tpu_custom_call.1} parent=1 // pred_fallthru
      _
    %v60 = vld [vmem:[#allocation2] sm:$0xff]
    %v61 = vld [vmem:[#allocation2 + $0x8] sm:$0xff]
    %v62 = vld [vmem:[#allocation5] sm:$0xff]
    %v63 = vld [vmem:[#allocation5 + $0x8] sm:$0xff]
    %v64 = vand.u32 2147483647, %v60
    %v65 = vand.u32 2147483647, %v61
    %v66 = vsub.f32 0.0, %v64
    %v67 = vsub.f32 0.0, %v65
    %v68 = vmul.f32 %v66, 1.442695
    %v69 = vpow.pop %v68
    %v70 = vmul.f32 %v67, 1.442695
    %v71 = vpow.pop %v70
    %v72 = vmax.f32 %v60, 0.0
    %v73 = vmax.f32 %v61, 0.0
    %v74 = vmul.f32 %v60, %v62
    %v75 = vmul.f32 %v61, %v63
    %v76 = vsub.f32 %v72, %v74
    %v77 = vsub.f32 %v73, %v75
    %v78 = vadd.f32 %v69, 1.0
    %v79 = vlog2.pop %v78
    %v80 = vmul.f32 %v79, 0.6931472
    %v81 = vmul.f32 -0.5, %v69
    %v82 = vadd.f32 %v81, 1.0
    %v83 = vmul.f32 %v82, %v69
    %v84 = vand.u32 2147483647, %v69
    %vm85 = vcmp.lt.f32.partialorder %v84, 0.0004427343
    %v86 = vsel %vm85, %v83, %v80
    %v87 = vadd.f32 %v71, 1.0
    %v88 = vlog2.pop %v87
    %v89 = vmul.f32 %v88, 0.6931472
    %v90 = vmul.f32 -0.5, %v71
    %v91 = vadd.f32 %v90, 1.0
    %v92 = vmul.f32 %v91, %v71
    %v93 = vand.u32 2147483647, %v71
    %vm94 = vcmp.lt.f32.partialorder %v93, 0.0004427343
    %v95 = vsel %vm94, %v92, %v89
    %v96 = vadd.f32 %v76, %v86
    %v97 = vadd.f32 %v77, %v95
    %v98 = vsub.f32 0.0, %v96
    %v99 = vsub.f32 0.0, %v97
    %v100 = vmul.f32 %v98, 1.442695
    %v101 = vpow.pop %v100
    %v102 = vmul.f32 %v99, 1.442695
    %v103 = vpow.pop %v102
    %v104 = vsub.f32 1.0, %v101
    %v105 = vsub.f32 1.0, %v103
    %v106 = vmul.f32 %v104, %v104
    %v107 = vmul.f32 %v105, %v105
    %v108 = vmul.f32 %v106, %v96
    %v109 = vmul.f32 %v107, %v97
    %v110 = vadd.f32 %v69, 1.0
    %v111 = vadd.f32 %v71, 1.0
    %v112 = vrcp.pop %v110
    %v113 = vmul.f32 1.0, %v112
    %v114 = vrcp.pop %v111
    %v115 = vmul.f32 1.0, %v114
    %vm116 = vcmp.ge.f32.partialorder %v60, 0.0
    %vm117 = vcmp.ge.f32.partialorder %v61, 0.0
    %v118 = vmul.f32 %v69, %v113
    %v119 = vmul.f32 %v71, %v115
    %v120 = vsel %vm116, %v113, %v118
    %v121 = vsel %vm117, %v115, %v119
    %v122 = vmul.f32 %v120, %v62
    %v123 = vmul.f32 %v121, %v63
    %v124 = vld [vmem:[#allocation7] sm:$0xff]
    %v125 = vadd.f32 %v108, %v109
    %v126 = vadd.f32 %v124, %v125
    %127 = vst [vmem:[#allocation7] sm:$0xff] %v126
    %v128 = vld [vmem:[#allocation7 + $0x8] sm:$0xff]
    %v129 = vadd.f32 %v122, %v123
    %v130 = vadd.f32 %v128, %v129
    %131 = vst [vmem:[#allocation7 + $0x8] sm:$0xff] %v130
    %v132 = vld [vmem:[#allocation7 + $0x10] sm:$0xff]
    %v133 = vadd.f32 %v120, %v121
    %v134 = vadd.f32 %v132, %v133
    %135 = vst [vmem:[#allocation7 + $0x10] sm:$0xff] %v134
    %v136 = vld [vmem:[#allocation7 + $0x18] sm:$0xff]
    %v137 = vadd.f32 %v62, %v63
    %v138 = vadd.f32 %v136, %v137
    %139 = vst [vmem:[#allocation7 + $0x18] sm:$0xff] %v138
    // Predicated region
    $region22: #{tpu_custom_call.1} parent=1 // pred_check
      _
    $region23: #{tpu_custom_call.1} parent=1 // pred_check_branch
      %141 = sbr.rel (0) target = $region25
    $region24: #{tpu_custom_call.1} parent=1 // pred_region
      %s143 = ssub.s32 512, 512
      %144 = vsyncadd [#allocation4], %s143
      %s145 = sshll.u32 [#allocation7], 4
      %s146 = int_to_ptr.vmem [resolvable:$true] %s145
      %151 = dma.vmem_to_hbm [thread:$0]  %s146, 512, %s2, [#allocation4], 128, 128, 8
    $region25: #{tpu_custom_call.1} parent=1 // pred_fallthru
      _
    // Predicated region
    $region26: #{tpu_custom_call.1} parent=1 // pred_check
      _
    $region27: #{tpu_custom_call.1} parent=1 // pred_check_branch
      %153 = sbr.rel (0) target = $region29
    $region28: #{tpu_custom_call.1} parent=1 // pred_region
      %154 = dma.done [#allocation4], 512
    $region29: #{tpu_custom_call.1} parent=1 // pred_fallthru
      _
    %155 = vsyncpa [#allocation3], 1
    %156 = vsyncpa [#allocation6], 1
    %157 = vsyncpa [#allocation4], 1

</llo_original>
